<compile_context>
chip_gen: v5e
topology: v5e:2x2
jax: 0.10.0
libtpu: 0.0.40
codegen_flags: <defaults>
</compile_context>

<pallas_src>
import functools

import jax
import jax.numpy as jnp
from jax import lax
from jax.experimental import pallas as pl
from jax.experimental.pallas import tpu as pltpu

_LANE = 128


def _binary_focal_kernel(logits_ref, targets_ref, out_ref, *, alpha, gamma):
    """One tile of binary (C == 2) focal loss.

    logits_ref : (R, 256) float  -- interleaved row-major layout:
                 lane 2j = class-0 logit, lane 2j+1 = class-1 logit of sample j.
    targets_ref: (R, 256) int8   -- target class id repeated on both class slots;
                 padded samples carry the sentinel value 2 (== C).
    out_ref    : (1, 1, 256) f32 -- lane-dense per-tile partial sums.
    """
    x = logits_ref[...].astype(jnp.float32)
    t = targets_ref[...].astype(jnp.int32)
    r, l = x.shape

    lane = lax.broadcasted_iota(jnp.int32, (r, l), 1)
    lane_class = jnp.bitwise_and(lane, 1)            # class id owned by this lane slot
    is_tgt = lane_class == t                         # exactly one true lane per valid sample

    # Signed logit: +z at the target-class slot, -z at the other slot, so the
    # pair-sum over a sample's two slots equals the margin  z_t - z_other.
    s = jnp.where(is_tgt, x, -x)

    # Pair-sum via XLU lane rotations. Direction-agnostic: rolling the lane iota
    # with the same rotation tells us which candidate actually delivered lane k^1.
    s_a = pltpu.roll(s, 1, axis=1)
    s_b = pltpu.roll(s, l - 1, axis=1)
    lane_a = pltpu.roll(lane, 1, axis=1)
    partner = jnp.where(lane_a == jnp.bitwise_xor(lane, 1), s_a, s_b)
    margin = s + partner                             # z_t - z_other (identical on both slots)

    # ce = softplus(-margin), stable; 1 - pt = sigmoid(margin), stable.
    u = -margin
    a = jnp.exp(-jnp.abs(u))                         # EUP exp, a in (0, 1]
    ce = jnp.maximum(u, 0.0) + jnp.log(1.0 + a)      # EUP log, argument in (1, 2]
    # Exact divide costs the same single EUP reciprocal push as approx=True; the
    # Newton refinement is VPU filler while the kernel is HBM-bound.
    one_minus_pt = jnp.where(u >= 0.0, 1.0, a) / (1.0 + a)

    g = float(gamma)
    if g == int(g) and 0 <= int(g) <= 8:
        fw = jnp.ones_like(one_minus_pt)
        for _ in range(int(g)):                      # gamma=2 -> x*x, pure VPU
            fw = fw * one_minus_pt
    else:
        # x**g == exp(g * log(x)); guard x == 0 (g > 0) to keep things finite.
        safe = jnp.maximum(one_minus_pt, jnp.float32(1e-30))
        fw = jnp.where(one_minus_pt > 0.0,
                       jnp.exp(jnp.float32(g) * jnp.log(safe)), 0.0)

    if alpha is not None:
        tf = lane_class.astype(jnp.float32)          # equals t on the counted lane
        fw = (jnp.float32(alpha) * tf + (1.0 - jnp.float32(alpha)) * (1.0 - tf)) * fw

    # Count each sample exactly once (its target-class lane). Sentinel-padded
    # samples (t == 2) match no lane and contribute zero -- no index masking.
    loss = jnp.where(is_tgt, fw * ce, 0.0)
    out_ref[...] = jnp.sum(loss, axis=0, keepdims=True)[None, :, :]


def _focal_loss_ref(logits, targets, alpha=0.25, gamma=2.0, reduction="mean"):
    """Pure-JAX reference matching the PyTorch module (also the C != 2 fallback)."""
    logits = logits.astype(jnp.float32)
    lse = jax.nn.logsumexp(logits, axis=-1)
    tgt_logit = jnp.take_along_axis(
        logits, targets[:, None].astype(jnp.int32), axis=-1)[:, 0]
    ce = lse - tgt_logit
    pt = jnp.exp(-ce)
    fw = (1.0 - pt) ** gamma
    if alpha is not None:
        tf = targets.astype(jnp.float32)
        fw = (alpha * tf + (1.0 - alpha) * (1.0 - tf)) * fw
    loss = fw * ce
    if reduction == "mean":
        return jnp.mean(loss)
    if reduction == "sum":
        return jnp.sum(loss)
    return loss


def focal_loss(logits, targets, alpha=0.25, gamma=2.0, reduction="mean",
               block_rows=2048):
    """Focal loss. logits: [N, C] float (f32 or bf16), targets: [N] int. Scalar f32 out."""
    n, c = logits.shape

    if reduction not in ("mean", "sum"):
        # TODO(synk): reduction='none' needs the per-sample loss written back out; not wired.
        raise NotImplementedError("reduction='none' not implemented in the Pallas path")

    if c != 2:
        # TODO(synk): general-C Pallas path (class-tiled online logsumexp) not wired; the
        # module's alpha weighting is only meaningful for binary targets, so fall back to XLA.
        return _focal_loss_ref(logits, targets, alpha, gamma, reduction)

    # ---- tile sizing: rows of 128 samples, VMEM-aware block, >= 2 tiles when useful ----
    rows = pl.cdiv(n, _LANE)
    itemsize = jnp.dtype(logits.dtype).itemsize
    bytes_per_row = _LANE * c * (itemsize + 1)           # logits + int8 targets per 128 samples
    vmem_budget = 12 * 1024 * 1024                       # double-buffered inputs; v5e/v6e/v7x safe
    max_rows_vmem = max(8, (vmem_budget // (2 * bytes_per_row)) // 8 * 8)
    block_rows = max(1, min(block_rows, max_rows_vmem, rows))
    num_tiles = pl.cdiv(rows, block_rows)
    if num_tiles == 1 and rows >= 16:
        num_tiles = 2                                    # keep both v7x TensorCores busy
    block_rows = pl.cdiv(rows, num_tiles)                # rebalance across tiles
    if num_tiles > 1:
        block_rows = pl.cdiv(block_rows, 8) * 8          # sublane-aligned tiles
    rows_pad = num_tiles * block_rows
    n_pad = rows_pad * _LANE

    # ---- layout: NO transpose. Row-major [N, 2] flattens for free into interleaved
    # [rows, 256] rows; only the tail pad (if any) costs a copy. ----
    flat = logits.reshape(n * c)
    tgt = jnp.repeat(targets.astype(jnp.int8), c)        # target id on both class slots
    if n_pad > n:
        pad = (n_pad - n) * c
        flat = jnp.pad(flat, (0, pad))                   # zero logits for padded samples
        tgt = jnp.pad(tgt, (0, pad), constant_values=c)  # sentinel class -> zero contribution
    logits_tiles = flat.reshape(rows_pad, c * _LANE)
    tgt_tiles = tgt.reshape(rows_pad, c * _LANE)

    kernel = functools.partial(_binary_focal_kernel, alpha=alpha, gamma=gamma)

    partials = pl.pallas_call(
        kernel,
        out_shape=jax.ShapeDtypeStruct((num_tiles, 1, c * _LANE), jnp.float32),
        grid=(num_tiles,),
        in_specs=[
            pl.BlockSpec((block_rows, c * _LANE), lambda i: (i, 0)),   # logits tile
            pl.BlockSpec((block_rows, c * _LANE), lambda i: (i, 0)),   # targets tile
        ],
        out_specs=pl.BlockSpec((1, 1, c * _LANE), lambda i: (i, 0, 0)),  # per-tile partials
        compiler_params=pltpu.CompilerParams(
            dimension_semantics=("parallel",)),
    )(logits_tiles, tgt_tiles)

    total = jnp.sum(partials)
    if reduction == "sum":
        return total
    return total / jnp.float32(n)


if __name__ == "__main__":
    run = jax.jit(focal_loss,
                  static_argnames=("alpha", "gamma", "reduction", "block_rows"))

    key = jax.random.PRNGKey(0)
    k1, k2, k3, k4 = jax.random.split(key, 4)

    # Case 1: the module's intended use -- binary line-level classification, small N.
    n1, c1 = 8, 2
    logits1 = jax.random.normal(k1, (n1, c1), dtype=jnp.float32)
    targets1 = jax.random.randint(k2, (n1,), 0, c1, dtype=jnp.int32)
    out1 = jax.block_until_ready(run(logits1, targets1))
    ref1 = _focal_loss_ref(logits1, targets1, 0.25, 2.0, "mean")
    assert jnp.allclose(out1, ref1, atol=1e-5, rtol=1e-4), (out1, ref1)

    # Case 2: multi-tile grid + sentinel-padded tail (block_rows forced small).
    n2, c2 = 3000, 2
    logits2 = jax.random.normal(k3, (n2, c2), dtype=jnp.float32)
    targets2 = jax.random.randint(k4, (n2,), 0, c2, dtype=jnp.int32)
    out2 = jax.block_until_ready(run(logits2, targets2, block_rows=8))
    ref2 = _focal_loss_ref(logits2, targets2, 0.25, 2.0, "mean")
    assert jnp.allclose(out2, ref2, atol=1e-5, rtol=1e-4), (out2, ref2)

    print("KERNEL_OK")
</pallas_src>

<mosaic_0001>
module attributes {stable_mosaic.version = 11 : i64} {
  func.func @_binary_focal_kernel(%arg0: i32, %arg1: memref<1x256xf32, #tpu.memory_space<vmem>>, %arg2: memref<1x256xi8, #tpu.memory_space<vmem>>, %arg3: memref<1x1x256xf32, #tpu.memory_space<vmem>>) attributes {dimension_semantics = [#tpu.dimension_semantics<parallel>], iteration_bounds = array<i64: 1>, scalar_prefetch = 0 : i64, scratch_operands = 0 : i64, tpu.core_type = #tpu.core_type<tc>, window_params = [{transform_indices = @transform_0, window_bounds = array<i64: 1, 256>}, {transform_indices = @transform_1, window_bounds = array<i64: 1, 256>}, {transform_indices = @transform_2, window_bounds = array<i64: 1, 1, 256>}]} {
    %c0 = arith.constant 0 : index
    %c0_0 = arith.constant 0 : index
    %0 = vector.load %arg1[%c0, %c0_0] : memref<1x256xf32, #tpu.memory_space<vmem>>, vector<1x256xf32>
    %c0_1 = arith.constant 0 : index
    %c0_2 = arith.constant 0 : index
    %1 = vector.load %arg2[%c0_1, %c0_2] : memref<1x256xi8, #tpu.memory_space<vmem>>, vector<1x256xi8>
    %2 = arith.extsi %1 : vector<1x256xi8> to vector<1x256xi32>
    %3 = tpu.iota {dimensions = array<i32: 1>} : vector<1x256xi32>
    %c1_i32 = arith.constant 1 : i32
    %4 = vector.broadcast %c1_i32 : i32 to vector<1x256xi32>
    %5 = arith.andi %3, %4 : vector<1x256xi32>
    %6 = arith.cmpi eq, %5, %2 : vector<1x256xi32>
    %cst = arith.constant 0.000000e+00 : f32
    %7 = vector.broadcast %cst : f32 to vector<1x256xf32>
    %8 = arith.subf %7, %0 : vector<1x256xf32>
    %9 = arith.select %6, %0, %8 : vector<1x256xi1>, vector<1x256xf32>
    %c1_i32_3 = arith.constant 1 : i32
    %10 = tpu.dynamic_rotate %9 by %c1_i32_3 dim 1 : vector<1x256xf32>, i32 -> vector<1x256xf32>
    %c255_i32 = arith.constant 255 : i32
    %11 = tpu.dynamic_rotate %9 by %c255_i32 dim 1 : vector<1x256xf32>, i32 -> vector<1x256xf32>
    %c1_i32_4 = arith.constant 1 : i32
    %12 = tpu.dynamic_rotate %3 by %c1_i32_4 dim 1 : vector<1x256xi32>, i32 -> vector<1x256xi32>
    %c1_i32_5 = arith.constant 1 : i32
    %13 = vector.broadcast %c1_i32_5 : i32 to vector<1x256xi32>
    %14 = arith.xori %3, %13 : vector<1x256xi32>
    %15 = arith.cmpi eq, %12, %14 : vector<1x256xi32>
    %16 = arith.select %15, %10, %11 : vector<1x256xi1>, vector<1x256xf32>
    %17 = arith.addf %9, %16 : vector<1x256xf32>
    %cst_6 = arith.constant 0.000000e+00 : f32
    %18 = vector.broadcast %cst_6 : f32 to vector<1x256xf32>
    %19 = arith.subf %18, %17 : vector<1x256xf32>
    %20 = math.absf %19 : vector<1x256xf32>
    %cst_7 = arith.constant 0.000000e+00 : f32
    %21 = vector.broadcast %cst_7 : f32 to vector<1x256xf32>
    %22 = arith.subf %21, %20 : vector<1x256xf32>
    %23 = math.exp %22 : vector<1x256xf32>
    %cst_8 = arith.constant 0.000000e+00 : f32
    %24 = vector.broadcast %cst_8 : f32 to vector<1x256xf32>
    %25 = arith.maximumf %19, %24 : vector<1x256xf32>
    %cst_9 = arith.constant 1.000000e+00 : f32
    %26 = vector.broadcast %cst_9 : f32 to vector<1x256xf32>
    %27 = arith.addf %26, %23 : vector<1x256xf32>
    %28 = math.log %27 : vector<1x256xf32>
    %29 = arith.addf %25, %28 : vector<1x256xf32>
    %cst_10 = arith.constant 0.000000e+00 : f32
    %30 = vector.broadcast %cst_10 : f32 to vector<1x256xf32>
    %31 = arith.cmpf oge, %19, %30 : vector<1x256xf32>
    %cst_11 = arith.constant 1.000000e+00 : f32
    %32 = vector.broadcast %cst_11 : f32 to vector<1x256xf32>
    %33 = arith.select %31, %32, %23 : vector<1x256xi1>, vector<1x256xf32>
    %cst_12 = arith.constant 1.000000e+00 : f32
    %34 = vector.broadcast %cst_12 : f32 to vector<1x256xf32>
    %35 = arith.addf %34, %23 : vector<1x256xf32>
    %36 = arith.divf %33, %35 : vector<1x256xf32>
    %cst_13 = arith.constant 1.000000e+00 : f32
    %37 = vector.broadcast %cst_13 : f32 to vector<1x256xf32>
    %38 = arith.mulf %37, %36 : vector<1x256xf32>
    %39 = arith.mulf %38, %36 : vector<1x256xf32>
    %40 = arith.sitofp %5 : vector<1x256xi32> to vector<1x256xf32>
    %cst_14 = arith.constant 2.500000e-01 : f32
    %41 = vector.broadcast %cst_14 : f32 to vector<1x256xf32>
    %42 = arith.mulf %41, %40 : vector<1x256xf32>
    %cst_15 = arith.constant 1.000000e+00 : f32
    %cst_16 = arith.constant 2.500000e-01 : f32
    %43 = arith.subf %cst_15, %cst_16 : f32
    %cst_17 = arith.constant 1.000000e+00 : f32
    %44 = vector.broadcast %cst_17 : f32 to vector<1x256xf32>
    %45 = arith.subf %44, %40 : vector<1x256xf32>
    %46 = vector.broadcast %43 : f32 to vector<1x256xf32>
    %47 = arith.mulf %46, %45 : vector<1x256xf32>
    %48 = arith.addf %42, %47 : vector<1x256xf32>
    %49 = arith.mulf %48, %39 : vector<1x256xf32>
    %50 = arith.mulf %49, %29 : vector<1x256xf32>
    %cst_18 = arith.constant 0.000000e+00 : f32
    %51 = vector.broadcast %cst_18 : f32 to vector<1x256xf32>
    %52 = arith.select %6, %50, %51 : vector<1x256xi1>, vector<1x256xf32>
    %cst_19 = arith.constant dense<0.000000e+00> : vector<256xf32>
    %53 = vector.multi_reduction <add>, %52, %cst_19 [0] : vector<1x256xf32> to vector<256xf32>
    %54 = vector.shape_cast %53 : vector<256xf32> to vector<1x256xf32>
    %55 = vector.shape_cast %54 : vector<1x256xf32> to vector<1x1x256xf32>
    %c0_20 = arith.constant 0 : index
    %c0_21 = arith.constant 0 : index
    %c0_22 = arith.constant 0 : index
    %56 = vector.load %arg3[%c0_20, %c0_21, %c0_22] : memref<1x1x256xf32, #tpu.memory_space<vmem>>, vector<1x1x256xf32>
    tpu.vector_store %arg3[%c0_20, %c0_21, %c0_22], %55 {strides = array<i32>} : memref<1x1x256xf32, #tpu.memory_space<vmem>>, vector<1x1x256xf32>,
    return
  }
  func.func @transform_0(%arg0: i32) -> (i32, i32) {
    %c0_i32 = arith.constant 0 : i32
    %c0_i32_0 = arith.constant 0 : i32
    return %arg0, %c0_i32 : i32, i32
  }
  func.func @transform_1(%arg0: i32) -> (i32, i32) {
    %c0_i32 = arith.constant 0 : i32
    %c0_i32_0 = arith.constant 0 : i32
    return %arg0, %c0_i32 : i32, i32
  }
  func.func @transform_2(%arg0: i32) -> (i32, i32, i32) {
    %c0_i32 = arith.constant 0 : i32
    %c0_i32_0 = arith.constant 0 : i32
    %c0_i32_1 = arith.constant 0 : i32
    return %arg0, %c0_i32, %c0_i32_0 : i32, i32, i32
  }
}

</mosaic_0001>

<llo_original>
// kernel: focal_loss.1
$region0: #{focal_loss.1}
  #allocation0 [shape = 'u32[]', space=smem, size = 0x4, offset = 0x4, fixed_abs, tag = 'smem constant byte address 0x4 - core index']
  #allocation1 [shape = 'u32[72,128]{1,0:T(1,128)}', space=vmem, size = 0x9000, scoped, tag = 'internal scratch']
  %s0 = inlined_call_operand.vmem [shape: f32[1,256], index: 0, kind: input, shape index: {}]
  %s1 = inlined_call_operand.vmem [shape: s8[1,256], index: 1, kind: input, shape index: {}]
  %s2 = inlined_call_operand.vmem [shape: f32[1,1,256], index: 2, kind: output, shape index: {}]
  %s3 = sld [smem:[#allocation0]]
  $region18: #{focal_loss.1} parent=0
    _
  %s5 = ssub.s32 1, %s3
  %s6 = scalar_select 0, %s5, %s3
  // Predicated region
  $region2: #{focal_loss.1} parent=0 // pred_check
    _
  $region3: #{focal_loss.1} parent=0 // pred_check_branch
    %8 = sbr.rel (0) target = $region5
  $region4: #{focal_loss.1} parent=0 // pred_region
    _
  $region5: #{focal_loss.1} parent=0 // pred_fallthru
    _
  // Predicated region
  $region6: #{focal_loss.1} parent=0 // pred_check
    _
  $region7: #{focal_loss.1} parent=0 // pred_check_branch
    %10 = sbr.rel (0) target = $region9
  $region8: #{focal_loss.1} parent=0 // pred_region
    _
  $region9: #{focal_loss.1} parent=0 // pred_fallthru
    _
  %v11 = vld [vmem:[%s0] sm:$0x3]
  %v12 = vld [vmem:[%s1] sm:$0x3]
  %v13 = vunpack.c.0.s8 %v12
  %v14 = vlaneseq
  %v15 = vand.u32 %v14, 127
  %v16 = vadd.s32 %v15, 128
  %v17 = vand.u32 %v15, 1
  %v18 = vand.u32 %v16, 1
  %v19 = vperm.slane %v13, 0
  %v20 = vperm.slane %v13, 4
  %vm21 = vcmp.eq.s32.totalorder %v17, %v19
  %vm22 = vcmp.eq.s32.totalorder %v18, %v20
  %v23 = vsub.f32 0.0, %v11
  %v25 = vperm.slane %v11, 0
  %v26 = vperm.slane %v11, 1
  %v30 = vperm.slane %v23, 0
  %v31 = vperm.slane %v23, 1
  %v34 = vsel %vm21, %v25, %v30
  %v35 = vsel %vm22, %v26, %v31
  %36 = vrot.lane.b32.xlu0 %v34, 1
  %v37 = vpop.permute.xlu0 %36
  %38 = vrot.lane.b32.xlu0 %v35, 1
  %v39 = vpop.permute.xlu0 %38
  %vm40 = vcmp.lt.s32.totalorder %v15, 1
  %v41 = vsel %vm40, %v37, %v39
  %v42 = vsel %vm40, %v39, %v37
  %43 = vrot.lane.b32.xlu0 %v34, 127
  %v44 = vpop.permute.xlu0 %43
  %45 = vrot.lane.b32.xlu0 %v35, 127
  %v46 = vpop.permute.xlu0 %45
  %vm47 = vcmp.lt.s32.totalorder %v15, 127
  %v48 = vsel %vm47, %v44, %v46
  %v49 = vsel %vm47, %v46, %v44
  %50 = vrot.lane.b32.xlu0 %v15, 1
  %v51 = vpop.permute.xlu0 %50
  %52 = vrot.lane.b32.xlu0 %v16, 1
  %v53 = vpop.permute.xlu0 %52
  %v54 = vsel %vm40, %v51, %v53
  %v55 = vsel %vm40, %v53, %v51
  %v56 = vxor.u32 %v15, 1
  %v57 = vxor.u32 %v16, 1
  %vm58 = vcmp.eq.s32.totalorder %v55, %v56
  %vm59 = vcmp.eq.s32.totalorder %v54, %v57
  %v60 = vsel %vm58, %v42, %v48
  %v61 = vsel %vm59, %v41, %v49
  %v62 = vadd.f32 %v34, %v60
  %v63 = vadd.f32 %v35, %v61
  %v64 = vsub.f32 0.0, %v62
  %v65 = vsub.f32 0.0, %v63
  %v66 = vand.u32 2147483647, %v64
  %v67 = vand.u32 2147483647, %v65
  %v68 = vsub.f32 0.0, %v66
  %v69 = vsub.f32 0.0, %v67
  %v70 = vmul.f32 %v68, 1.442695
  %v71 = vpow.pop %v70
  %v72 = vmul.f32 %v69, 1.442695
  %v73 = vpow.pop %v72
  %v74 = vmax.f32 %v64, 0.0
  %v75 = vmax.f32 %v65, 0.0
  %v76 = vadd.f32 %v71, 1.0
  %v77 = vadd.f32 %v73, 1.0
  %v78 = vlog2.pop %v76
  %v79 = vmul.f32 %v78, 0.6931472
  %v80 = vlog2.pop %v77
  %v81 = vmul.f32 %v80, 0.6931472
  %v82 = vadd.f32 %v74, %v79
  %v83 = vadd.f32 %v75, %v81
  %vm84 = vcmp.ge.f32.partialorder %v64, 0.0
  %vm85 = vcmp.ge.f32.partialorder %v65, 0.0
  %v86 = vsel %vm84, 1.0, %v71
  %v87 = vsel %vm85, 1.0, %v73
  %v88 = vrcp.pop %v76
  %v89 = vmul.f32 %v76, %v88
  %v90 = vsub.f32 1.0, %v89
  %v91 = vmul.f32 %v88, %v90
  %v92 = vadd.f32 %v88, %v91
  %vm93 = vweird.f32 %v76
  %vm94 = vweird.f32 %v88
  %vm95 = vmor %vm93, %vm94
  %v96 = vsel %vm95, %v88, %v92
  %v97 = vand.u32 2147483647, %v76
  %vm98 = vcmp.eq.f32.partialorder %v97, 8.507059e+37
  %v99 = vand.u32 %v76, 2147483648
  %v100 = vor.u32 1.1754944e-38, %v99
  %v101 = vsel %vm98, %v100, %v96
  %v102 = vmul.f32 %v86, %v101
  %v103 = vrcp.pop %v77
  %v104 = vmul.f32 %v77, %v103
  %v105 = vsub.f32 1.0, %v104
  %v106 = vmul.f32 %v103, %v105
  %v107 = vadd.f32 %v103, %v106
  %vm108 = vweird.f32 %v77
  %vm109 = vweird.f32 %v103
  %vm110 = vmor %vm108, %vm109
  %v111 = vsel %vm110, %v103, %v107
  %v112 = vand.u32 2147483647, %v77
  %vm113 = vcmp.eq.f32.partialorder %v112, 8.507059e+37
  %v114 = vand.u32 %v77, 2147483648
  %v115 = vor.u32 1.1754944e-38, %v114
  %v116 = vsel %vm113, %v115, %v111
  %v117 = vmul.f32 %v87, %v116
  %v118 = vmul.f32 %v102, %v102
  %v119 = vmul.f32 %v117, %v117
  %v120 = vcvt.s32.f32 %v17
  %v121 = vcvt.s32.f32 %v18
  %v122 = vmul.f32 %v120, 0.25
  %v123 = vmul.f32 %v121, 0.25
  %v124 = vsub.f32 1.0, %v120
  %v125 = vsub.f32 1.0, %v121
  %v126 = vmul.f32 %v124, 0.75
  %v127 = vmul.f32 %v125, 0.75
  %v128 = vadd.f32 %v122, %v126
  %v129 = vadd.f32 %v123, %v127
  %v130 = vmul.f32 %v128, %v118
  %v131 = vmul.f32 %v129, %v119
  %v132 = vmul.f32 %v130, %v82
  %v133 = vmul.f32 %v131, %v83
  %v134 = vsel %vm21, %v132, 0.0
  %v135 = vsel %vm22, %v133, 0.0
  %v136 = vadd.f32 %v134, 0.0
  %v137 = vadd.f32 %v135, 0.0
  %v140 = vrot.slane %v137, 7
  %vm141 = vcmask 1040384
  %v142 = vsel %vm141, %v136, %v140
  %v144 = vlaneseq
  %vm145 = vcmp.ge.s32.totalorder %v144, 0
  %vm146 = vcmp.lt.s32.totalorder %v144, 256
  %vm147 = vmand %vm145, %vm146
  %148 = vst.msk [vmem:[%s2] sm:$0x3] %vm147, %v142
  // Predicated region
  $region10: #{focal_loss.1} parent=0 // pred_check
    _
  $region11: #{focal_loss.1} parent=0 // pred_check_branch
    %150 = sbr.rel (0) target = $region13
  $region12: #{focal_loss.1} parent=0 // pred_region
    _
  $region13: #{focal_loss.1} parent=0 // pred_fallthru
    _
  // Predicated region
  $region14: #{focal_loss.1} parent=0 // pred_check
    _
  $region15: #{focal_loss.1} parent=0 // pred_check_branch
    %152 = sbr.rel (0) target = $region17
  $region16: #{focal_loss.1} parent=0 // pred_region
    _
  $region17: #{focal_loss.1} parent=0 // pred_fallthru
    _

</llo_original>
